<compile_context>
chip_gen: v7x
topology: tpu7x:2x2x1
jax: 0.10.0
libtpu: 0.0.40
codegen_flags: <defaults>
</compile_context>

<pallas_src>
import math
from functools import partial

import jax
import jax.numpy as jnp
from jax.experimental import pallas as pl
from jax.experimental.pallas import tpu as pltpu


def _policy_kernel(x_ref, w1_ref, w2_ref, w3_ref, b_ref, out_ref,
                   *, hidden, action_dim, act_dtype):
    """All operands transposed: batch is the lane axis.

    x_ref  : (state_dim, tm)
    w1_ref : (2H, state_dim)      fused layer-1 weights (both heads)
    w2_ref : (2H, 2H)             block-diagonal layer-2 weights
    w3_ref : (2A, 2H)             block-diagonal layer-3 weights
    b_ref  : (4H + 2A, 1)         packed bias column [b1 | b2 | b3]
    out_ref: (2A, tm)             rows [0:A] = mean^T, rows [A:2A] = std^T
    """
    H2 = 2 * hidden
    A2 = 2 * action_dim

    xT = x_ref[...]
    b = b_ref[...]                       # (4H + 2A, 1) — broadcasts over lanes
    b1 = b[:H2, :]
    b2 = b[H2:2 * H2, :]
    b3 = b[2 * H2:2 * H2 + A2, :]

    # Layer 1: fused heads, single (2H, S) @ (S, tm) matmul.
    z1 = jnp.dot(w1_ref[...], xT, preferred_element_type=jnp.float32) + b1
    h1 = jnp.tanh(z1.astype(act_dtype))
    # Layer 2: block-diagonal weight keeps the two heads independent.
    z2 = jnp.dot(w2_ref[...], h1, preferred_element_type=jnp.float32) + b2
    h2 = jnp.tanh(z2.astype(act_dtype))
    # Layer 3: -> rows [mean^T ; log_std^T].
    z3 = jnp.dot(w3_ref[...], h2, preferred_element_type=jnp.float32) + b3

    # std = exp(log_std) on the bottom A rows; exp of the (discarded) mean
    # rows is masked by the where (no arithmetic masking -> no NaN/Inf leak).
    row = jax.lax.broadcasted_iota(jnp.int32, z3.shape, 0)
    ez = jnp.exp(z3.astype(act_dtype)).astype(z3.dtype)
    out_ref[...] = jnp.where(row < action_dim, z3, ez).astype(out_ref.dtype)


def _block_diag(a, b):
    ra, ca = a.shape
    rb, cb = b.shape
    top = jnp.concatenate([a, jnp.zeros((ra, cb), a.dtype)], axis=1)
    bot = jnp.concatenate([jnp.zeros((rb, ca), b.dtype), b], axis=1)
    return jnp.concatenate([top, bot], axis=0)


def pack_params(params):
    """Pack per-head parameters into 4 transposed, fused operands."""
    w1t = jnp.concatenate([params["w1m"], params["w1s"]], axis=1).T    # (2H, S)
    w2t = _block_diag(params["w2m"], params["w2s"]).T                  # (2H, 2H)
    w3t = _block_diag(params["w3m"], params["w3s"]).T                  # (2A, 2H)
    b = jnp.concatenate(
        [params["b1m"], params["b1s"],
         params["b2m"], params["b2s"],
         params["b3m"], params["b3s"]], axis=1).T                      # (4H+2A, 1)
    return w1t, w2t, w3t, b


def _round_up(n, m):
    return ((n + m - 1) // m) * m


def _pick_batch_tile(batch, block_batch):
    """Batch is the lane axis: the tile must be a multiple of 128 unless it
    covers the whole batch. For batch >= 256 aim for >= 2 tiles so v7x's two
    TensorCores both get work (grid axis is 'parallel')."""
    if batch < 256:
        return batch
    tm = min(block_batch, _round_up(pl.cdiv(batch, 2), 128))
    return max(128, min(tm, _round_up(batch, 128)))


def policy_network_forward(x, params, *, block_batch=4096,
                           transcendental_dtype=jnp.float32):
    """Returns (mean, std) — the loc/scale of the Normal distribution the
    PyTorch module's forward() constructs.

    transcendental_dtype=jnp.bfloat16 halves EUP work on v6e/v7x (keep f32 on
    v5e, which has no bf16 VPU/EUP, and when 1e-5 accuracy is required)."""
    batch, state_dim = x.shape
    hidden = params["w2m"].shape[0]
    action_dim = params["w3m"].shape[1]
    H2, A2 = 2 * hidden, 2 * action_dim

    w1t, w2t, w3t, b = pack_params(params)

    # Transpose once in the wrapper so the kernel sees batch on lanes.
    xT = x.T                                                   # (S, batch)

    tm = _pick_batch_tile(batch, block_batch)
    grid = (pl.cdiv(batch, tm),)
    # NOTE: a partial last tile is edge-masked by Pallas; its garbage lanes
    # still run through tanh/exp but are never stored (harmless).

    kernel = partial(_policy_kernel, hidden=hidden, action_dim=action_dim,
                     act_dtype=transcendental_dtype)

    flops = 2 * batch * (state_dim * H2 + H2 * H2 + H2 * A2)
    transcendentals = batch * (2 * H2 + A2)
    bytes_accessed = 4 * (x.size + w1t.size + w2t.size + w3t.size + b.size
                          + batch * A2)

    # Explicit VMEM budget: x/out tiles double-buffered + resident weights +
    # intermediate activations, with headroom; capped below v7x's 64 MiB.
    tile_io = 4 * tm * (state_dim + A2)
    weights_bytes = 4 * (w1t.size + w2t.size + w3t.size + b.size)
    interm = 4 * tm * (2 * H2 + A2)
    vmem_limit = int(min(max(2 * tile_io + weights_bytes + interm + (8 << 20),
                             32 << 20), 56 << 20))

    outT = pl.pallas_call(
        kernel,
        out_shape=jax.ShapeDtypeStruct((A2, batch), jnp.float32),
        grid=grid,
        in_specs=[
            pl.BlockSpec((state_dim, tm), lambda i: (0, i)),   # x^T tile
            pl.BlockSpec(w1t.shape, lambda i: (0, 0)),         # resident
            pl.BlockSpec(w2t.shape, lambda i: (0, 0)),         # resident
            pl.BlockSpec(w3t.shape, lambda i: (0, 0)),         # resident
            pl.BlockSpec(b.shape, lambda i: (0, 0)),           # resident
        ],
        out_specs=pl.BlockSpec((A2, tm), lambda i: (0, i)),
        compiler_params=pltpu.CompilerParams(
            dimension_semantics=("parallel",),
            vmem_limit_bytes=vmem_limit),
        cost_estimate=pl.CostEstimate(
            flops=flops,
            transcendentals=transcendentals,
            bytes_accessed=bytes_accessed),
    )(xT, w1t, w2t, w3t, b)

    mean = outT[:action_dim, :].T
    std = outT[action_dim:, :].T
    return mean, std


def init_params(key, state_dim, action_dim, n_latent_var):
    """Deterministic 'he' (kaiming normal, relu gain) init for the Linear
    weights, zero biases — matching init_weights(m, init_type='he').
    Weights stored as (in, out) = transpose of PyTorch Linear storage."""
    def he(key, fan_in, shape):
        std = math.sqrt(2.0 / fan_in)
        return jax.random.normal(key, shape, dtype=jnp.float32) * std

    ks = jax.random.split(key, 6)
    return {
        # action_mu head
        "w1m": he(ks[0], state_dim, (state_dim, n_latent_var)),
        "b1m": jnp.zeros((1, n_latent_var), jnp.float32),
        "w2m": he(ks[1], n_latent_var, (n_latent_var, n_latent_var)),
        "b2m": jnp.zeros((1, n_latent_var), jnp.float32),
        "w3m": he(ks[2], n_latent_var, (n_latent_var, action_dim)),
        "b3m": jnp.zeros((1, action_dim), jnp.float32),
        # action_log_std head
        "w1s": he(ks[3], state_dim, (state_dim, n_latent_var)),
        "b1s": jnp.zeros((1, n_latent_var), jnp.float32),
        "w2s": he(ks[4], n_latent_var, (n_latent_var, n_latent_var)),
        "b2s": jnp.zeros((1, n_latent_var), jnp.float32),
        "w3s": he(ks[5], n_latent_var, (n_latent_var, action_dim)),
        "b3s": jnp.zeros((1, action_dim), jnp.float32),
    }


def _reference(x, p):
    """Pure-JAX reference of the same forward pass (unfused)."""
    h = jnp.tanh(x @ p["w1m"] + p["b1m"])
    h = jnp.tanh(h @ p["w2m"] + p["b2m"])
    mean = h @ p["w3m"] + p["b3m"]
    g = jnp.tanh(x @ p["w1s"] + p["b1s"])
    g = jnp.tanh(g @ p["w2s"] + p["b2s"])
    std = jnp.exp(g @ p["w3s"] + p["b3s"])
    return mean, std


# TODO(synk): torch.distributions.Normal construction has no Pallas
# equivalent; the kernel returns (mean, std), the distribution's parameters.

if __name__ == "__main__":
    state_dim, action_dim, n_latent_var = 16, 8, 32

    key = jax.random.PRNGKey(0)
    k_param, k_x1, k_x2 = jax.random.split(key, 3)
    params = init_params(k_param, state_dim, action_dim, n_latent_var)

    # --- small single-tile check (f32) ---
    batch = 8
    x = jax.random.normal(k_x1, (batch, state_dim), dtype=jnp.float32)
    mean, std = policy_network_forward(x, params)
    jax.block_until_ready((mean, std))
    ref_mean, ref_std = _reference(x, params)
    assert mean.shape == (batch, action_dim) and std.shape == (batch, action_dim)
    assert jnp.allclose(mean, ref_mean, atol=1e-5, rtol=1e-5)
    assert jnp.allclose(std, ref_std, atol=1e-5, rtol=1e-5)

    # --- multi-tile check (2 parallel grid steps, partial edge tile, f32) ---
    batch2 = 384
    x2 = jax.random.normal(k_x2, (batch2, state_dim), dtype=jnp.float32)
    mean2, std2 = policy_network_forward(x2, params)
    jax.block_until_ready((mean2, std2))
    ref_mean2, ref_std2 = _reference(x2, params)
    assert jnp.allclose(mean2, ref_mean2, atol=1e-5, rtol=1e-5)
    assert jnp.allclose(std2, ref_std2, atol=1e-5, rtol=1e-5)

    # --- bf16-transcendental path (EUP lever for v6e/v7x; skipped on older) ---
    kind = jax.devices()[0].device_kind.lower()
    if not any(t in kind for t in ("v2", "v3", "v4", "v5")):
        mean_b, std_b = policy_network_forward(
            x, params, transcendental_dtype=jnp.bfloat16)
        jax.block_until_ready((mean_b, std_b))
        assert jnp.allclose(mean_b, ref_mean, atol=1e-1, rtol=1e-1)
        assert jnp.allclose(std_b, ref_std, atol=1e-1, rtol=1e-1)

    print("KERNEL_OK")
</pallas_src>

<mosaic_0001>
module attributes {stable_mosaic.version = 11 : i64} {
  func.func @_policy_kernel(%arg0: i32, %arg1: memref<16x8xf32, #tpu.memory_space<vmem>>, %arg2: memref<64x16xf32, #tpu.memory_space<vmem>>, %arg3: memref<64x64xf32, #tpu.memory_space<vmem>>, %arg4: memref<16x64xf32, #tpu.memory_space<vmem>>, %arg5: memref<144x1xf32, #tpu.memory_space<vmem>>, %arg6: memref<16x8xf32, #tpu.memory_space<vmem>>) attributes {dimension_semantics = [#tpu.dimension_semantics<parallel>], iteration_bounds = array<i64: 1>, scalar_prefetch = 0 : i64, scratch_operands = 0 : i64, tpu.core_type = #tpu.core_type<tc>, window_params = [{transform_indices = @transform_0, window_bounds = array<i64: 16, 8>}, {pipeline_mode = #tpu.pipeline_mode<synchronous>, transform_indices = @transform_1, window_bounds = array<i64: 64, 16>}, {pipeline_mode = #tpu.pipeline_mode<synchronous>, transform_indices = @transform_2, window_bounds = array<i64: 64, 64>}, {pipeline_mode = #tpu.pipeline_mode<synchronous>, transform_indices = @transform_3, window_bounds = array<i64: 16, 64>}, {pipeline_mode = #tpu.pipeline_mode<synchronous>, transform_indices = @transform_4, window_bounds = array<i64: 144, 1>}, {transform_indices = @transform_5, window_bounds = array<i64: 16, 8>}]} {
    %c0 = arith.constant 0 : index
    %c0_0 = arith.constant 0 : index
    %0 = vector.load %arg1[%c0, %c0_0] : memref<16x8xf32, #tpu.memory_space<vmem>>, vector<16x8xf32>
    %c0_1 = arith.constant 0 : index
    %c0_2 = arith.constant 0 : index
    %1 = vector.load %arg5[%c0_1, %c0_2] : memref<144x1xf32, #tpu.memory_space<vmem>>, vector<144x1xf32>
    %2 = vector.extract_strided_slice %1 {offsets = [0, 0], sizes = [64, 1], strides = [1, 1]} : vector<144x1xf32> to vector<64x1xf32>
    %3 = vector.extract_strided_slice %1 {offsets = [64, 0], sizes = [64, 1], strides = [1, 1]} : vector<144x1xf32> to vector<64x1xf32>
    %4 = vector.extract_strided_slice %1 {offsets = [128, 0], sizes = [16, 1], strides = [1, 1]} : vector<144x1xf32> to vector<16x1xf32>
    %c0_3 = arith.constant 0 : index
    %c0_4 = arith.constant 0 : index
    %5 = vector.load %arg2[%c0_3, %c0_4] : memref<64x16xf32, #tpu.memory_space<vmem>>, vector<64x16xf32>
    %cst = arith.constant dense<0.000000e+00> : vector<64x8xf32>
    %6 = tpu.matmul %5, %0, %cst {dimension_numbers = #tpu.dot_dimension_numbers<[1], [0], [0], [1], [0, 0, 1, 1], [], []>} : vector<64x16xf32>, vector<16x8xf32>, vector<64x8xf32> -> vector<64x8xf32>
    %7 = vector.broadcast %2 : vector<64x1xf32> to vector<64x8xf32>
    %8 = arith.addf %6, %7 : vector<64x8xf32>
    %9 = math.tanh %8 : vector<64x8xf32>
    %c0_5 = arith.constant 0 : index
    %c0_6 = arith.constant 0 : index
    %10 = vector.load %arg3[%c0_5, %c0_6] : memref<64x64xf32, #tpu.memory_space<vmem>>, vector<64x64xf32>
    %cst_7 = arith.constant dense<0.000000e+00> : vector<64x8xf32>
    %11 = tpu.matmul %10, %9, %cst_7 {dimension_numbers = #tpu.dot_dimension_numbers<[1], [0], [0], [1], [0, 0, 1, 1], [], []>} : vector<64x64xf32>, vector<64x8xf32>, vector<64x8xf32> -> vector<64x8xf32>
    %12 = vector.broadcast %3 : vector<64x1xf32> to vector<64x8xf32>
    %13 = arith.addf %11, %12 : vector<64x8xf32>
    %14 = math.tanh %13 : vector<64x8xf32>
    %c0_8 = arith.constant 0 : index
    %c0_9 = arith.constant 0 : index
    %15 = vector.load %arg4[%c0_8, %c0_9] : memref<16x64xf32, #tpu.memory_space<vmem>>, vector<16x64xf32>
    %cst_10 = arith.constant dense<0.000000e+00> : vector<16x8xf32>
    %16 = tpu.matmul %15, %14, %cst_10 {dimension_numbers = #tpu.dot_dimension_numbers<[1], [0], [0], [1], [0, 0, 1, 1], [], []>} : vector<16x64xf32>, vector<64x8xf32>, vector<16x8xf32> -> vector<16x8xf32>
    %17 = vector.broadcast %4 : vector<16x1xf32> to vector<16x8xf32>
    %18 = arith.addf %16, %17 : vector<16x8xf32>
    %19 = tpu.iota {dimensions = array<i32: 0>} : vector<16x8xi32>
    %20 = math.exp %18 : vector<16x8xf32>
    %c8_i32 = arith.constant 8 : i32
    %21 = vector.broadcast %c8_i32 : i32 to vector<16x8xi32>
    %22 = arith.cmpi slt, %19, %21 : vector<16x8xi32>
    %23 = arith.select %22, %18, %20 : vector<16x8xi1>, vector<16x8xf32>
    %c0_11 = arith.constant 0 : index
    %c0_12 = arith.constant 0 : index
    %24 = vector.load %arg6[%c0_11, %c0_12] : memref<16x8xf32, #tpu.memory_space<vmem>>, vector<16x8xf32>
    tpu.vector_store %arg6[%c0_11, %c0_12], %23 {strides = array<i32>} : memref<16x8xf32, #tpu.memory_space<vmem>>, vector<16x8xf32>,
    return
  }
  func.func @transform_0(%arg0: i32) -> (i32, i32) {
    %c0_i32 = arith.constant 0 : i32
    %c0_i32_0 = arith.constant 0 : i32
    return %c0_i32, %arg0 : i32, i32
  }
  func.func @transform_1(%arg0: i32) -> (i32, i32) {
    %c0_i32 = arith.constant 0 : i32
    %c0_i32_0 = arith.constant 0 : i32
    %c0_i32_1 = arith.constant 0 : i32
    return %c0_i32, %c0_i32_0 : i32, i32
  }
  func.func @transform_2(%arg0: i32) -> (i32, i32) {
    %c0_i32 = arith.constant 0 : i32
    %c0_i32_0 = arith.constant 0 : i32
    %c0_i32_1 = arith.constant 0 : i32
    return %c0_i32, %c0_i32_0 : i32, i32
  }
  func.func @transform_3(%arg0: i32) -> (i32, i32) {
    %c0_i32 = arith.constant 0 : i32
    %c0_i32_0 = arith.constant 0 : i32
    %c0_i32_1 = arith.constant 0 : i32
    return %c0_i32, %c0_i32_0 : i32, i32
  }
  func.func @transform_4(%arg0: i32) -> (i32, i32) {
    %c0_i32 = arith.constant 0 : i32
    %c0_i32_0 = arith.constant 0 : i32
    %c0_i32_1 = arith.constant 0 : i32
    return %c0_i32, %c0_i32_0 : i32, i32
  }
  func.func @transform_5(%arg0: i32) -> (i32, i32) {
    %c0_i32 = arith.constant 0 : i32
    %c0_i32_0 = arith.constant 0 : i32
    return %c0_i32, %arg0 : i32, i32
  }
}

</mosaic_0001>

<llo_original>
// kernel: tpu_custom_call.1
$region0: #{tpu_custom_call.1}
  #allocation0 [shape = 'u32[]', space=smem, size = 0x4, offset = 0x4, fixed_abs, tag = 'smem constant byte address 0x4 - core index']
  #allocation1 [shape = 'u32[144,128]{1,0:T(1,128)}', space=vmem, size = 0x12000, scoped, tag = 'internal scratch']
  %s0 = inlined_call_operand.vmem [shape: f32[16,8], index: 0, kind: input, shape index: {}]
  %s1 = inlined_call_operand.vmem [shape: f32[64,16], index: 1, kind: input, shape index: {}]
  %s2 = inlined_call_operand.vmem [shape: f32[64,64], index: 2, kind: input, shape index: {}]
  %s3 = inlined_call_operand.vmem [shape: f32[16,64], index: 3, kind: input, shape index: {}]
  %s4 = inlined_call_operand.vmem [shape: f32[144,1], index: 4, kind: input, shape index: {}]
  %s5 = inlined_call_operand.vmem [shape: f32[16,8], index: 5, kind: output, shape index: {}]
  %s6 = sld [smem:[#allocation0]]
  $region30: #{tpu_custom_call.1} parent=0
    _
  %s8 = ssub.s32 1, %s6
  %s9 = scalar_select 0, %s8, %s6
  // Predicated region
  $region2: #{tpu_custom_call.1} parent=0 // pred_check
    _
  $region3: #{tpu_custom_call.1} parent=0 // pred_check_branch
    %11 = sbr.rel (0) target = $region5
  $region4: #{tpu_custom_call.1} parent=0 // pred_region
    _
  $region5: #{tpu_custom_call.1} parent=0 // pred_fallthru
    _
  // Predicated region
  $region6: #{tpu_custom_call.1} parent=0 // pred_check
    _
  $region7: #{tpu_custom_call.1} parent=0 // pred_check_branch
    %13 = sbr.rel (0) target = $region9
  $region8: #{tpu_custom_call.1} parent=0 // pred_region
    _
  $region9: #{tpu_custom_call.1} parent=0 // pred_fallthru
    _
  // Predicated region
  $region10: #{tpu_custom_call.1} parent=0 // pred_check
    _
  $region11: #{tpu_custom_call.1} parent=0 // pred_check_branch
    %15 = sbr.rel (0) target = $region13
  $region12: #{tpu_custom_call.1} parent=0 // pred_region
    _
  $region13: #{tpu_custom_call.1} parent=0 // pred_fallthru
    _
  // Predicated region
  $region14: #{tpu_custom_call.1} parent=0 // pred_check
    _
  $region15: #{tpu_custom_call.1} parent=0 // pred_check_branch
    %17 = sbr.rel (0) target = $region17
  $region16: #{tpu_custom_call.1} parent=0 // pred_region
    _
  $region17: #{tpu_custom_call.1} parent=0 // pred_fallthru
    _
  // Predicated region
  $region18: #{tpu_custom_call.1} parent=0 // pred_check
    _
  $region19: #{tpu_custom_call.1} parent=0 // pred_check_branch
    %19 = sbr.rel (0) target = $region21
  $region20: #{tpu_custom_call.1} parent=0 // pred_region
    _
  $region21: #{tpu_custom_call.1} parent=0 // pred_fallthru
    _
  %v20 = vld [vmem:[%s0] sm:$0xff]
  %v21 = vld [vmem:[%s0 + $0x8] sm:$0xff]
  %v22 = vld [vmem:[%s4] sm:$0xff]
  %v23 = vld [vmem:[%s4 + $0x8] sm:$0xff]
  %v24 = vld [vmem:[%s4 + $0x10] sm:$0xff]
  %v25 = vld [vmem:[%s4 + $0x18] sm:$0xff]
  %v26 = vld [vmem:[%s4 + $0x20] sm:$0xff]
  %v27 = vld [vmem:[%s4 + $0x28] sm:$0xff]
  %v28 = vld [vmem:[%s4 + $0x30] sm:$0xff]
  %v29 = vld [vmem:[%s4 + $0x38] sm:$0xff]
  %v30 = vld [vmem:[%s4 + $0x40] sm:$0xff]
  %v31 = vld [vmem:[%s4 + $0x48] sm:$0xff]
  %v32 = vld [vmem:[%s4 + $0x50] sm:$0xff]
  %v33 = vld [vmem:[%s4 + $0x58] sm:$0xff]
  %v34 = vld [vmem:[%s4 + $0x60] sm:$0xff]
  %v35 = vld [vmem:[%s4 + $0x68] sm:$0xff]
  %v36 = vld [vmem:[%s4 + $0x70] sm:$0xff]
  %v37 = vld [vmem:[%s4 + $0x78] sm:$0xff]
  %v38 = vld [vmem:[%s4 + $0x80] sm:$0xff]
  %v39 = vld [vmem:[%s4 + $0x88] sm:$0xff]
  %v40 = vld [vmem:[%s1] sm:$0xff]
  %v41 = vld [vmem:[%s1 + $0x8] sm:$0xff]
  %v42 = vld [vmem:[%s1 + $0x10] sm:$0xff]
  %v43 = vld [vmem:[%s1 + $0x18] sm:$0xff]
  %v44 = vld [vmem:[%s1 + $0x20] sm:$0xff]
  %v45 = vld [vmem:[%s1 + $0x28] sm:$0xff]
  %v46 = vld [vmem:[%s1 + $0x30] sm:$0xff]
  %v47 = vld [vmem:[%s1 + $0x38] sm:$0xff]
  %49 = vset.pattern.permute.xlu0 0
  %50 = vperm.xlu0 %49, %v22
  %v51 = vpop.permute.xlu0 %50
  %54 = vset.pattern.permute.xlu0 0
  %55 = vperm.xlu0 %54, %v23
  %v56 = vpop.permute.xlu0 %55
  %59 = vset.pattern.permute.xlu0 0
  %60 = vperm.xlu0 %59, %v24
  %v61 = vpop.permute.xlu0 %60
  %64 = vset.pattern.permute.xlu0 0
  %65 = vperm.xlu0 %64, %v25
  %v66 = vpop.permute.xlu0 %65
  %69 = vset.pattern.permute.xlu0 0
  %70 = vperm.xlu0 %69, %v26
  %v71 = vpop.permute.xlu0 %70
  %74 = vset.pattern.permute.xlu0 0
  %75 = vperm.xlu0 %74, %v27
  %v76 = vpop.permute.xlu0 %75
  %79 = vset.pattern.permute.xlu0 0
  %80 = vperm.xlu0 %79, %v28
  %v81 = vpop.permute.xlu0 %80
  %84 = vset.pattern.permute.xlu0 0
  %85 = vperm.xlu0 %84, %v29
  %v86 = vpop.permute.xlu0 %85
  %vm88 = vcmask 130048
  %v90 = vsel %vm88, %v40, 0
  %v93 = vsel %vm88, %v41, 0
  %v96 = vsel %vm88, %v42, 0
  %v99 = vsel %vm88, %v43, 0
  %v102 = vsel %vm88, %v44, 0
  %v105 = vsel %vm88, %v45, 0
  %v108 = vsel %vm88, %v46, 0
  %v111 = vsel %vm88, %v47, 0
  %113 = vmatprep.subr.mxu0 0.0
  %114 = vmatpush1.msra.mxu0 %v20
  %115 = vmatprep.subr.mxu0 0.0
  %116 = vmatpush1.msra.mxu0 %v21
  %117 = vmatprep.subr.mxu0 0.0
  %118 = vmatpush1.msra.mxu0 0.0
  %119 = vmatprep.subr.mxu0 0.0
  %120 = vmatpush1.msra.mxu0 0.0
  %121 = vmatprep.subr.mxu0 0.0
  %122 = vmatpush1.msra.mxu0 0.0
  %123 = vmatprep.subr.mxu0 0.0
  %124 = vmatpush1.msra.mxu0 0.0
  %125 = vmatprep.subr.mxu0 0.0
  %126 = vmatpush1.msra.mxu0 0.0
  %127 = vmatprep.subr.mxu0 0.0
  %128 = vmatpush1.msra.mxu0 0.0
  %129 = vmatprep.subr.mxu0 0.0
  %130 = vmatpush1.msra.mxu0 0.0
  %131 = vmatprep.subr.mxu0 0.0
  %132 = vmatpush1.msra.mxu0 0.0
  %133 = vmatprep.subr.mxu0 0.0
  %134 = vmatpush1.msra.mxu0 0.0
  %135 = vmatprep.subr.mxu0 0.0
  %136 = vmatpush1.msra.mxu0 0.0
  %137 = vmatprep.subr.mxu0 0.0
  %138 = vmatpush1.msra.mxu0 0.0
  %139 = vmatprep.subr.mxu0 0.0
  %140 = vmatpush1.msra.mxu0 0.0
  %141 = vmatprep.subr.mxu0 0.0
  %142 = vmatpush1.msra.mxu0 0.0
  %143 = vmatprep.subr.mxu0 0.0
  %144 = vmatpush1.msra.mxu0 0.0
  %145 = vmatprep.subr.mxu0 0.0
  %146 = vmatpush1.msra.mxu0 0.0
  %147 = vmatprep.subr.mxu0 0.0
  %148 = vmatpush1.msra.mxu0 0.0
  %149 = vmatprep.subr.mxu0 0.0
  %150 = vmatpush1.msra.mxu0 0.0
  %151 = vmatprep.subr.mxu0 0.0
  %152 = vmatpush1.msra.mxu0 0.0
  %153 = vmatprep.subr.mxu0 0.0
  %154 = vmatpush1.msra.mxu0 0.0
  %155 = vmatprep.subr.mxu0 0.0
  %156 = vmatpush1.msra.mxu0 0.0
  %157 = vmatprep.subr.mxu0 0.0
  %158 = vmatpush1.msra.mxu0 0.0
  %159 = vmatprep.subr.mxu0 0.0
  %160 = vmatpush1.msra.mxu0 0.0
  %161 = vmatprep.subr.mxu0 0.0
  %162 = vmatpush1.msra.mxu0 0.0
  %163 = vmatprep.subr.mxu0 0.0
  %164 = vmatpush1.msra.mxu0 0.0
  %165 = vmatprep.subr.mxu0 0.0
  %166 = vmatpush1.msra.mxu0 0.0
  %167 = vmatprep.subr.mxu0 0.0
  %168 = vmatpush1.msra.mxu0 0.0
  %169 = vmatprep.subr.mxu0 0.0
  %170 = vmatpush1.msra.mxu0 0.0
  %171 = vmatprep.subr.mxu0 0.0
  %172 = vmatpush1.msra.mxu0 0.0
  %173 = vmatprep.subr.mxu0 0.0
  %174 = vmatpush1.msra.mxu0 0.0
  %175 = vmatprep.subr.mxu0 0.0
  %176 = vmatpush1.msra.mxu0 0.0
  %177 = vmatprep.mubr.f32.mxu0 0.0
  %178 = vmatmul.mubr.f32.gmra.mrb[0].mxu0 %v90
  %v179 = vpop.f32.mrb[0].mxu0
  %v180 = vadd.f32 %v51, %v179
  %v181 = vpop.f32.mrb[0].mxu0
  %182 = vmatprep.mubr.f32.mxu0 0.0
  %183 = vmatmul.mubr.f32.gmra.mrb[0].mxu0 %v93
  %v184 = vpop.f32.mrb[0].mxu0
  %v185 = vadd.f32 %v56, %v184
  %v186 = vpop.f32.mrb[0].mxu0
  %187 = vmatprep.mubr.f32.mxu0 0.0
  %188 = vmatmul.mubr.f32.gmra.mrb[0].mxu0 %v96
  %v189 = vpop.f32.mrb[0].mxu0
  %v190 = vadd.f32 %v61, %v189
  %v191 = vpop.f32.mrb[0].mxu0
  %192 = vmatprep.mubr.f32.mxu0 0.0
  %193 = vmatmul.mubr.f32.gmra.mrb[0].mxu0 %v99
  %v194 = vpop.f32.mrb[0].mxu0
  %v195 = vadd.f32 %v66, %v194
  %v196 = vpop.f32.mrb[0].mxu0
  %197 = vmatprep.mubr.f32.mxu0 0.0
  %198 = vmatmul.mubr.f32.gmra.mrb[0].mxu0 %v102
  %v199 = vpop.f32.mrb[0].mxu0
  %v200 = vadd.f32 %v71, %v199
  %v201 = vpop.f32.mrb[0].mxu0
  %202 = vmatprep.mubr.f32.mxu0 0.0
  %203 = vmatmul.mubr.f32.gmra.mrb[0].mxu0 %v105
  %v204 = vpop.f32.mrb[0].mxu0
  %v205 = vadd.f32 %v76, %v204
  %v206 = vpop.f32.mrb[0].mxu0
  %207 = vmatprep.mubr.f32.mxu0 0.0
  %208 = vmatmul.mubr.f32.gmra.mrb[0].mxu0 %v108
  %v209 = vpop.f32.mrb[0].mxu0
  %v210 = vadd.f32 %v81, %v209
  %v211 = vpop.f32.mrb[0].mxu0
  %212 = vmatprep.mubr.f32.mxu0 0.0
  %213 = vmatmul.mubr.f32.gmra.mrb[0].mxu0 %v111
  %v214 = vpop.f32.mrb[0].mxu0
  %v215 = vadd.f32 %v86, %v214
  %v216 = vpop.f32.mrb[0].mxu0
  %217 = vdwg.mxu0
  %v218 = vtanh.pop %v180
  %v219 = vtanh.pop %v185
  %v220 = vtanh.pop %v190
  %v221 = vtanh.pop %v195
  %v222 = vtanh.pop %v200
  %v223 = vtanh.pop %v205
  %v224 = vtanh.pop %v210
  %v225 = vtanh.pop %v215
  %v226 = vld [vmem:[%s2] sm:$0xff]
  %v227 = vld [vmem:[%s2 + $0x8] sm:$0xff]
  %v228 = vld [vmem:[%s2 + $0x10] sm:$0xff]
  %v229 = vld [vmem:[%s2 + $0x18] sm:$0xff]
  %v230 = vld [vmem:[%s2 + $0x20] sm:$0xff]
  %v231 = vld [vmem:[%s2 + $0x28] sm:$0xff]
  %v232 = vld [vmem:[%s2 + $0x30] sm:$0xff]
  %v233 = vld [vmem:[%s2 + $0x38] sm:$0xff]
  %235 = vset.pattern.permute.xlu0 0
  %236 = vperm.xlu0 %235, %v30
  %v237 = vpop.permute.xlu0 %236
  %240 = vset.pattern.permute.xlu0 0
  %241 = vperm.xlu0 %240, %v31
  %v242 = vpop.permute.xlu0 %241
  %245 = vset.pattern.permute.xlu0 0
  %246 = vperm.xlu0 %245, %v32
  %v247 = vpop.permute.xlu0 %246
  %250 = vset.pattern.permute.xlu0 0
  %251 = vperm.xlu0 %250, %v33
  %v252 = vpop.permute.xlu0 %251
  %255 = vset.pattern.permute.xlu0 0
  %256 = vperm.xlu0 %255, %v34
  %v257 = vpop.permute.xlu0 %256
  %260 = vset.pattern.permute.xlu0 0
  %261 = vperm.xlu0 %260, %v35
  %v262 = vpop.permute.xlu0 %261
  %265 = vset.pattern.permute.xlu0 0
  %266 = vperm.xlu0 %265, %v36
  %v267 = vpop.permute.xlu0 %266
  %270 = vset.pattern.permute.xlu0 0
  %271 = vperm.xlu0 %270, %v37
  %v272 = vpop.permute.xlu0 %271
  %vm274 = vcmask 523264
  %v276 = vsel %vm274, %v226, 0
  %v279 = vsel %vm274, %v227, 0
  %v282 = vsel %vm274, %v228, 0
  %v285 = vsel %vm274, %v229, 0
  %v288 = vsel %vm274, %v230, 0
  %v291 = vsel %vm274, %v231, 0
  %v294 = vsel %vm274, %v232, 0
  %v297 = vsel %vm274, %v233, 0
  %299 = vmatprep.subr.mxu0 0.0
  %300 = vmatpush1.msra.mxu0 %v218
  %301 = vmatprep.subr.mxu0 0.0
  %302 = vmatpush1.msra.mxu0 %v219
  %303 = vmatprep.subr.mxu0 0.0
  %304 = vmatpush1.msra.mxu0 %v220
  %305 = vmatprep.subr.mxu0 0.0
  %306 = vmatpush1.msra.mxu0 %v221
  %307 = vmatprep.subr.mxu0 0.0
  %308 = vmatpush1.msra.mxu0 %v222
  %309 = vmatprep.subr.mxu0 0.0
  %310 = vmatpush1.msra.mxu0 %v223
  %311 = vmatprep.subr.mxu0 0.0
  %312 = vmatpush1.msra.mxu0 %v224
  %313 = vmatprep.subr.mxu0 0.0
  %314 = vmatpush1.msra.mxu0 %v225
  %315 = vmatprep.subr.mxu0 0.0
  %316 = vmatpush1.msra.mxu0 0.0
  %317 = vmatprep.subr.mxu0 0.0
  %318 = vmatpush1.msra.mxu0 0.0
  %319 = vmatprep.subr.mxu0 0.0
  %320 = vmatpush1.msra.mxu0 0.0
  %321 = vmatprep.subr.mxu0 0.0
  %322 = vmatpush1.msra.mxu0 0.0
  %323 = vmatprep.subr.mxu0 0.0
  %324 = vmatpush1.msra.mxu0 0.0
  %325 = vmatprep.subr.mxu0 0.0
  %326 = vmatpush1.msra.mxu0 0.0
  %327 = vmatprep.subr.mxu0 0.0
  %328 = vmatpush1.msra.mxu0 0.0
  %329 = vmatprep.subr.mxu0 0.0
  %330 = vmatpush1.msra.mxu0 0.0
  %331 = vmatprep.subr.mxu0 0.0
  %332 = vmatpush1.msra.mxu0 0.0
  %333 = vmatprep.subr.mxu0 0.0
  %334 = vmatpush1.msra.mxu0 0.0
  %335 = vmatprep.subr.mxu0 0.0
  %336 = vmatpush1.msra.mxu0 0.0
  %337 = vmatprep.subr.mxu0 0.0
  %338 = vmatpush1.msra.mxu0 0.0
  %339 = vmatprep.subr.mxu0 0.0
  %340 = vmatpush1.msra.mxu0 0.0
  %341 = vmatprep.subr.mxu0 0.0
  %342 = vmatpush1.msra.mxu0 0.0
  %343 = vmatprep.subr.mxu0 0.0
  %344 = vmatpush1.msra.mxu0 0.0
  %345 = vmatprep.subr.mxu0 0.0
  %346 = vmatpush1.msra.mxu0 0.0
  %347 = vmatprep.subr.mxu0 0.0
  %348 = vmatpush1.msra.mxu0 0.0
  %349 = vmatprep.subr.mxu0 0.0
  %350 = vmatpush1.msra.mxu0 0.0
  %351 = vmatprep.subr.mxu0 0.0
  %352 = vmatpush1.msra.mxu0 0.0
  %353 = vmatprep.subr.mxu0 0.0
  %354 = vmatpush1.msra.mxu0 0.0
  %355 = vmatprep.subr.mxu0 0.0
  %356 = vmatpush1.msra.mxu0 0.0
  %357 = vmatprep.subr.mxu0 0.0
  %358 = vmatpush1.msra.mxu0 0.0
  %359 = vmatprep.subr.mxu0 0.0
  %360 = vmatpush1.msra.mxu0 0.0
  %361 = vmatprep.subr.mxu0 0.0
  %362 = vmatpush1.msra.mxu0 0.0
  %363 = vmatprep.mubr.f32.mxu0 0.0
  %364 = vmatmul.mubr.f32.gmra.mrb[0].mxu0 %v276
  %v365 = vpop.f32.mrb[0].mxu0
  %v366 = vadd.f32 %v237, %v365
  %v367 = vpop.f32.mrb[0].mxu0
  %368 = vmatprep.mubr.f32.mxu0 0.0
  %369 = vmatmul.mubr.f32.gmra.mrb[0].mxu0 %v279
  %v370 = vpop.f32.mrb[0].mxu0
  %v371 = vadd.f32 %v242, %v370
  %v372 = vpop.f32.mrb[0].mxu0
  %373 = vmatprep.mubr.f32.mxu0 0.0
  %374 = vmatmul.mubr.f32.gmra.mrb[0].mxu0 %v282
  %v375 = vpop.f32.mrb[0].mxu0
  %v376 = vadd.f32 %v247, %v375
  %v377 = vpop.f32.mrb[0].mxu0
  %378 = vmatprep.mubr.f32.mxu0 0.0
  %379 = vmatmul.mubr.f32.gmra.mrb[0].mxu0 %v285
  %v380 = vpop.f32.mrb[0].mxu0
  %v381 = vadd.f32 %v252, %v380
  %v382 = vpop.f32.mrb[0].mxu0
  %383 = vmatprep.mubr.f32.mxu0 0.0
  %384 = vmatmul.mubr.f32.gmra.mrb[0].mxu0 %v288
  %v385 = vpop.f32.mrb[0].mxu0
  %v386 = vadd.f32 %v257, %v385
  %v387 = vpop.f32.mrb[0].mxu0
  %388 = vmatprep.mubr.f32.mxu0 0.0
  %389 = vmatmul.mubr.f32.gmra.mrb[0].mxu0 %v291
  %v390 = vpop.f32.mrb[0].mxu0
  %v391 = vadd.f32 %v262, %v390
  %v392 = vpop.f32.mrb[0].mxu0
  %393 = vmatprep.mubr.f32.mxu0 0.0
  %394 = vmatmul.mubr.f32.gmra.mrb[0].mxu0 %v294
  %v395 = vpop.f32.mrb[0].mxu0
  %v396 = vadd.f32 %v267, %v395
  %v397 = vpop.f32.mrb[0].mxu0
  %398 = vmatprep.mubr.f32.mxu0 0.0
  %399 = vmatmul.mubr.f32.gmra.mrb[0].mxu0 %v297
  %v400 = vpop.f32.mrb[0].mxu0
  %v401 = vadd.f32 %v272, %v400
  %v402 = vpop.f32.mrb[0].mxu0
  %403 = vdwg.mxu0
  %v404 = vtanh.pop %v366
  %v405 = vtanh.pop %v371
  %v406 = vtanh.pop %v376
  %v407 = vtanh.pop %v381
  %v408 = vtanh.pop %v386
  %v409 = vtanh.pop %v391
  %v410 = vtanh.pop %v396
  %v411 = vtanh.pop %v401
  %v412 = vld [vmem:[%s3] sm:$0xff]
  %v413 = vld [vmem:[%s3 + $0x8] sm:$0xff]
  %415 = vset.pattern.permute.xlu0 0
  %416 = vperm.xlu0 %415, %v38
  %v417 = vpop.permute.xlu0 %416
  %420 = vset.pattern.permute.xlu0 0
  %421 = vperm.xlu0 %420, %v39
  %v422 = vpop.permute.xlu0 %421
  %v425 = vsel %vm274, %v412, 0
  %v428 = vsel %vm274, %v413, 0
  %430 = vmatprep.subr.mxu0 0.0
  %431 = vmatpush1.msra.mxu0 %v404
  %432 = vmatprep.subr.mxu0 0.0
  %433 = vmatpush1.msra.mxu0 %v405
  %434 = vmatprep.subr.mxu0 0.0
  %435 = vmatpush1.msra.mxu0 %v406
  %436 = vmatprep.subr.mxu0 0.0
  %437 = vmatpush1.msra.mxu0 %v407
  %438 = vmatprep.subr.mxu0 0.0
  %439 = vmatpush1.msra.mxu0 %v408
  %440 = vmatprep.subr.mxu0 0.0
  %441 = vmatpush1.msra.mxu0 %v409
  %442 = vmatprep.subr.mxu0 0.0
  %443 = vmatpush1.msra.mxu0 %v410
  %444 = vmatprep.subr.mxu0 0.0
  %445 = vmatpush1.msra.mxu0 %v411
  %446 = vmatprep.subr.mxu0 0.0
  %447 = vmatpush1.msra.mxu0 0.0
  %448 = vmatprep.subr.mxu0 0.0
  %449 = vmatpush1.msra.mxu0 0.0
  %450 = vmatprep.subr.mxu0 0.0
  %451 = vmatpush1.msra.mxu0 0.0
  %452 = vmatprep.subr.mxu0 0.0
  %453 = vmatpush1.msra.mxu0 0.0
  %454 = vmatprep.subr.mxu0 0.0
  %455 = vmatpush1.msra.mxu0 0.0
  %456 = vmatprep.subr.mxu0 0.0
  %457 = vmatpush1.msra.mxu0 0.0
  %458 = vmatprep.subr.mxu0 0.0
  %459 = vmatpush1.msra.mxu0 0.0
  %460 = vmatprep.subr.mxu0 0.0
  %461 = vmatpush1.msra.mxu0 0.0
  %462 = vmatprep.subr.mxu0 0.0
  %463 = vmatpush1.msra.mxu0 0.0
  %464 = vmatprep.subr.mxu0 0.0
  %465 = vmatpush1.msra.mxu0 0.0
  %466 = vmatprep.subr.mxu0 0.0
  %467 = vmatpush1.msra.mxu0 0.0
  %468 = vmatprep.subr.mxu0 0.0
  %469 = vmatpush1.msra.mxu0 0.0
  %470 = vmatprep.subr.mxu0 0.0
  %471 = vmatpush1.msra.mxu0 0.0
  %472 = vmatprep.subr.mxu0 0.0
  %473 = vmatpush1.msra.mxu0 0.0
  %474 = vmatprep.subr.mxu0 0.0
  %475 = vmatpush1.msra.mxu0 0.0
  %476 = vmatprep.subr.mxu0 0.0
  %477 = vmatpush1.msra.mxu0 0.0
  %478 = vmatprep.subr.mxu0 0.0
  %479 = vmatpush1.msra.mxu0 0.0
  %480 = vmatprep.subr.mxu0 0.0
  %481 = vmatpush1.msra.mxu0 0.0
  %482 = vmatprep.subr.mxu0 0.0
  %483 = vmatpush1.msra.mxu0 0.0
  %484 = vmatprep.subr.mxu0 0.0
  %485 = vmatpush1.msra.mxu0 0.0
  %486 = vmatprep.subr.mxu0 0.0
  %487 = vmatpush1.msra.mxu0 0.0
  %488 = vmatprep.subr.mxu0 0.0
  %489 = vmatpush1.msra.mxu0 0.0
  %490 = vmatprep.subr.mxu0 0.0
  %491 = vmatpush1.msra.mxu0 0.0
  %492 = vmatprep.subr.mxu0 0.0
  %493 = vmatpush1.msra.mxu0 0.0
  %494 = vmatprep.mubr.f32.mxu0 0.0
  %495 = vmatmul.mubr.f32.gmra.mrb[0].mxu0 %v425
  %v496 = vpop.f32.mrb[0].mxu0
  %v497 = vadd.f32 %v417, %v496
  %v498 = vpop.f32.mrb[0].mxu0
  %499 = vmatprep.mubr.f32.mxu0 0.0
  %500 = vmatmul.mubr.f32.gmra.mrb[0].mxu0 %v428
  %v501 = vpop.f32.mrb[0].mxu0
  %v502 = vadd.f32 %v422, %v501
  %v503 = vpop.f32.mrb[0].mxu0
  %504 = vdwg.mxu0
  %v505 = vlaneseq
  %v506 = vshrl.u32 %v505, 7
  %v507 = vadd.s32 %v506, 8
  %v508 = vmul.f32 %v497, 1.442695
  %v509 = vpow.pop %v508
  %v510 = vmul.f32 %v502, 1.442695
  %v511 = vpow.pop %v510
  %vm512 = vcmp.lt.s32.totalorder %v506, 8
  %vm513 = vcmp.lt.s32.totalorder %v507, 8
  %v514 = vsel %vm512, %v497, %v509
  %v515 = vsel %vm513, %v502, %v511
  %vm516 = vcmask 64512
  %517 = vst.msk [vmem:[%s5] sm:$0xff] %vm516, %v514
  %518 = vst.msk [vmem:[%s5 + $0x8] sm:$0xff] %vm516, %v515
  // Predicated region
  $region22: #{tpu_custom_call.1} parent=0 // pred_check
    _
  $region23: #{tpu_custom_call.1} parent=0 // pred_check_branch
    %520 = sbr.rel (0) target = $region25
  $region24: #{tpu_custom_call.1} parent=0 // pred_region
    _
  $region25: #{tpu_custom_call.1} parent=0 // pred_fallthru
    _
  // Predicated region
  $region26: #{tpu_custom_call.1} parent=0 // pred_check
    _
  $region27: #{tpu_custom_call.1} parent=0 // pred_check_branch
    %522 = sbr.rel (0) target = $region29
  $region28: #{tpu_custom_call.1} parent=0 // pred_region
    _
  $region29: #{tpu_custom_call.1} parent=0 // pred_fallthru
    _

</llo_original>
